<compile_context>
chip_gen: v7x
topology: tpu7x:2x2x1
jax: 0.10.0
libtpu: 0.0.40
codegen_flags: <defaults>
</compile_context>

<pallas_src>
import functools

import jax
import jax.numpy as jnp
from jax.experimental import pallas as pl
from jax.experimental.pallas import tpu as pltpu

_HEAD_LANES = 128  # lane-dense packed head width (actor 3 + critic 1, zero padded)


def _round_up(n, m):
    return ((n + m - 1) // m) * m


def _ppo_forward_kernel(x_ref, w1_ref, b1_ref, w2_ref, b2_ref,
                        wh_ref, bh_ref, out_ref):
    # Shared layer 1: bf16 MXU matmul, f32 accumulate, bias + ReLU in f32.
    h1 = jnp.dot(x_ref[...], w1_ref[...], preferred_element_type=jnp.float32)
    h1 = jnp.maximum(h1 + b1_ref[...], 0.0)
    # Shared layer 2.
    h2 = jnp.dot(h1.astype(w2_ref.dtype), w2_ref[...],
                 preferred_element_type=jnp.float32)
    h2 = jnp.maximum(h2 + b2_ref[...], 0.0)
    # Fused actor+critic head, zero-padded to 128 lanes -> unmasked stores.
    out_ref[...] = (
        jnp.dot(h2.astype(wh_ref.dtype), wh_ref[...],
                preferred_element_type=jnp.float32)
        + bh_ref[...]
    )


def init_params(key, state_dim, hidden_dim=64):
    """Deterministic PyTorch-Linear-style (uniform +/- 1/sqrt(fan_in)) init."""
    def linear(k, fan_in, fan_out):
        kw, kb = jax.random.split(k)
        bound = 1.0 / jnp.sqrt(jnp.float32(fan_in))
        w = jax.random.uniform(kw, (fan_in, fan_out), jnp.float32, -bound, bound)
        b = jax.random.uniform(kb, (fan_out,), jnp.float32, -bound, bound)
        return w, b

    k1, k2, k3, k4 = jax.random.split(key, 4)
    w1, b1 = linear(k1, state_dim, hidden_dim)
    w2, b2 = linear(k2, hidden_dim, hidden_dim)
    wa, ba = linear(k3, hidden_dim, 3)   # actor head
    wc, bc = linear(k4, hidden_dim, 1)   # critic head
    return dict(w1=w1, b1=b1, w2=w2, b2=b2, wa=wa, ba=ba, wc=wc, bc=bc)


def pack_params(params, compute_dtype=jnp.bfloat16):
    """One-time packing: pad hidden to 128 lanes, pack actor+critic into a
    128-lane head, pre-cast MXU operands to bf16. Biases stay f32."""
    w1, b1, w2, b2 = params["w1"], params["b1"], params["w2"], params["b2"]
    wa, ba, wc, bc = params["wa"], params["ba"], params["wc"], params["bc"]
    state_dim, hidden = w1.shape
    hp = _round_up(hidden, 128)

    w1p = jnp.zeros((state_dim, hp), jnp.float32).at[:, :hidden].set(w1)
    b1p = jnp.zeros((1, hp), jnp.float32).at[0, :hidden].set(b1)
    w2p = jnp.zeros((hp, hp), jnp.float32).at[:hidden, :hidden].set(w2)
    b2p = jnp.zeros((1, hp), jnp.float32).at[0, :hidden].set(b2)
    whp = (jnp.zeros((hp, _HEAD_LANES), jnp.float32)
           .at[:hidden, :3].set(wa)
           .at[:hidden, 3:4].set(wc))
    bhp = (jnp.zeros((1, _HEAD_LANES), jnp.float32)
           .at[0, :3].set(ba)
           .at[0, 3:4].set(bc))

    return dict(
        w1=w1p.astype(compute_dtype), b1=b1p,
        w2=w2p.astype(compute_dtype), b2=b2p,
        wh=whp.astype(compute_dtype), bh=bhp,
    )


@functools.partial(jax.jit, static_argnames=("block_rows",))
def ppo_policy_forward(x, packed, block_rows=512):
    """Fused PPOPolicy forward. Returns (action_logits (B,3), value (B,1))."""
    w1, b1 = packed["w1"], packed["b1"]
    w2, b2 = packed["w2"], packed["b2"]
    wh, bh = packed["wh"], packed["bh"]

    B, state_dim = x.shape
    hp = w1.shape[1]
    compute_dtype = w1.dtype

    # Batch tile: multiple of 16 (bf16 sublane packing), capped at block_rows.
    tb = min(_round_up(block_rows, 16), _round_up(B, 16))
    padded_b = _round_up(B, tb)

    xp = x.astype(compute_dtype)
    if padded_b != B:
        xp = jnp.pad(xp, ((0, padded_b - B), (0, 0)))

    out = pl.pallas_call(
        _ppo_forward_kernel,
        out_shape=jax.ShapeDtypeStruct((padded_b, _HEAD_LANES), jnp.float32),
        grid=(padded_b // tb,),
        in_specs=[
            pl.BlockSpec((tb, state_dim), lambda i: (i, 0)),        # x (streamed)
            pl.BlockSpec((state_dim, hp), lambda i: (0, 0)),        # w1 (resident)
            pl.BlockSpec((1, hp), lambda i: (0, 0)),                # b1
            pl.BlockSpec((hp, hp), lambda i: (0, 0)),               # w2
            pl.BlockSpec((1, hp), lambda i: (0, 0)),                # b2
            pl.BlockSpec((hp, _HEAD_LANES), lambda i: (0, 0)),      # wh
            pl.BlockSpec((1, _HEAD_LANES), lambda i: (0, 0)),       # bh
        ],
        out_specs=pl.BlockSpec((tb, _HEAD_LANES), lambda i: (i, 0)),
        compiler_params=pltpu.CompilerParams(
            dimension_semantics=("parallel",),
            vmem_limit_bytes=64 * 1024 * 1024,
        ),
    )(xp, w1, b1, w2, b2, wh, bh)

    out = out[:B]
    action_logits = out[:, :3]   # (B, 3)
    value = out[:, 3:4]          # (B, 1)
    return action_logits, value


def reference_forward(x, p):
    h1 = jnp.maximum(x @ p["w1"] + p["b1"], 0.0)
    h2 = jnp.maximum(h1 @ p["w2"] + p["b2"], 0.0)
    return h2 @ p["wa"] + p["ba"], h2 @ p["wc"] + p["bc"]


if __name__ == "__main__":
    key = jax.random.PRNGKey(0)
    kx, kp, kx2 = jax.random.split(key, 3)

    batch = 2
    state_dim = 32
    hidden_dim = 64

    params = init_params(kp, state_dim, hidden_dim)
    packed = pack_params(params)   # one-time packing/padding/casting

    # Small batch (exercises batch padding to the 16-row tile).
    x = jax.random.normal(kx, (batch, state_dim), dtype=jnp.float32)
    logits, value = ppo_policy_forward(x, packed)
    jax.block_until_ready((logits, value))

    ref_logits, ref_value = reference_forward(x, params)
    assert logits.shape == (batch, 3) and value.shape == (batch, 1)
    # bf16 MXU operands -> loosened tolerance vs the f32 reference.
    assert jnp.allclose(logits, ref_logits, atol=5e-2, rtol=5e-2)
    assert jnp.allclose(value, ref_value, atol=5e-2, rtol=5e-2)

    # Larger batch with a small block to exercise the multi-step grid path.
    x2 = jax.random.normal(kx2, (300, state_dim), dtype=jnp.float32)
    logits2, value2 = ppo_policy_forward(x2, packed, block_rows=128)
    jax.block_until_ready((logits2, value2))
    ref_logits2, ref_value2 = reference_forward(x2, params)
    assert logits2.shape == (300, 3) and value2.shape == (300, 1)
    assert jnp.allclose(logits2, ref_logits2, atol=5e-2, rtol=5e-2)
    assert jnp.allclose(value2, ref_value2, atol=5e-2, rtol=5e-2)

    print("KERNEL_OK")
</pallas_src>

<mosaic_0001>
module attributes {stable_mosaic.version = 11 : i64} {
  func.func @_ppo_forward_kernel(%arg0: i32, %arg1: memref<16x32xbf16, #tpu.memory_space<vmem>>, %arg2: memref<32x128xbf16, #tpu.memory_space<vmem>>, %arg3: memref<1x128xf32, #tpu.memory_space<vmem>>, %arg4: memref<128x128xbf16, #tpu.memory_space<vmem>>, %arg5: memref<1x128xf32, #tpu.memory_space<vmem>>, %arg6: memref<128x128xbf16, #tpu.memory_space<vmem>>, %arg7: memref<1x128xf32, #tpu.memory_space<vmem>>, %arg8: memref<16x128xf32, #tpu.memory_space<vmem>>) attributes {dimension_semantics = [#tpu.dimension_semantics<parallel>], iteration_bounds = array<i64: 1>, scalar_prefetch = 0 : i64, scratch_operands = 0 : i64, tpu.core_type = #tpu.core_type<tc>, window_params = [{transform_indices = @transform_0, window_bounds = array<i64: 16, 32>}, {pipeline_mode = #tpu.pipeline_mode<synchronous>, transform_indices = @transform_1, window_bounds = array<i64: 32, 128>}, {pipeline_mode = #tpu.pipeline_mode<synchronous>, transform_indices = @transform_2, window_bounds = array<i64: 1, 128>}, {pipeline_mode = #tpu.pipeline_mode<synchronous>, transform_indices = @transform_3, window_bounds = array<i64: 128, 128>}, {pipeline_mode = #tpu.pipeline_mode<synchronous>, transform_indices = @transform_4, window_bounds = array<i64: 1, 128>}, {pipeline_mode = #tpu.pipeline_mode<synchronous>, transform_indices = @transform_5, window_bounds = array<i64: 128, 128>}, {pipeline_mode = #tpu.pipeline_mode<synchronous>, transform_indices = @transform_6, window_bounds = array<i64: 1, 128>}, {transform_indices = @transform_7, window_bounds = array<i64: 16, 128>}]} {
    %c0 = arith.constant 0 : index
    %c0_0 = arith.constant 0 : index
    %0 = vector.load %arg1[%c0, %c0_0] : memref<16x32xbf16, #tpu.memory_space<vmem>>, vector<16x32xbf16>
    %c0_1 = arith.constant 0 : index
    %c0_2 = arith.constant 0 : index
    %1 = vector.load %arg2[%c0_1, %c0_2] : memref<32x128xbf16, #tpu.memory_space<vmem>>, vector<32x128xbf16>
    %cst = arith.constant dense<0.000000e+00> : vector<16x128xf32>
    %2 = tpu.matmul %0, %1, %cst {dimension_numbers = #tpu.dot_dimension_numbers<[1], [0], [0], [1], [0, 0, 1, 1], [], []>} : vector<16x32xbf16>, vector<32x128xbf16>, vector<16x128xf32> -> vector<16x128xf32>
    %c0_3 = arith.constant 0 : index
    %c0_4 = arith.constant 0 : index
    %3 = vector.load %arg3[%c0_3, %c0_4] : memref<1x128xf32, #tpu.memory_space<vmem>>, vector<1x128xf32>
    %4 = vector.broadcast %3 : vector<1x128xf32> to vector<16x128xf32>
    %5 = arith.addf %2, %4 : vector<16x128xf32>
    %cst_5 = arith.constant 0.000000e+00 : f32
    %6 = vector.broadcast %cst_5 : f32 to vector<16x128xf32>
    %7 = arith.maximumf %5, %6 : vector<16x128xf32>
    %8 = arith.truncf %7 : vector<16x128xf32> to vector<16x128xbf16>
    %c0_6 = arith.constant 0 : index
    %c0_7 = arith.constant 0 : index
    %9 = vector.load %arg4[%c0_6, %c0_7] : memref<128x128xbf16, #tpu.memory_space<vmem>>, vector<128x128xbf16>
    %cst_8 = arith.constant dense<0.000000e+00> : vector<16x128xf32>
    %10 = tpu.matmul %8, %9, %cst_8 {dimension_numbers = #tpu.dot_dimension_numbers<[1], [0], [0], [1], [0, 0, 1, 1], [], []>} : vector<16x128xbf16>, vector<128x128xbf16>, vector<16x128xf32> -> vector<16x128xf32>
    %c0_9 = arith.constant 0 : index
    %c0_10 = arith.constant 0 : index
    %11 = vector.load %arg5[%c0_9, %c0_10] : memref<1x128xf32, #tpu.memory_space<vmem>>, vector<1x128xf32>
    %12 = vector.broadcast %11 : vector<1x128xf32> to vector<16x128xf32>
    %13 = arith.addf %10, %12 : vector<16x128xf32>
    %cst_11 = arith.constant 0.000000e+00 : f32
    %14 = vector.broadcast %cst_11 : f32 to vector<16x128xf32>
    %15 = arith.maximumf %13, %14 : vector<16x128xf32>
    %16 = arith.truncf %15 : vector<16x128xf32> to vector<16x128xbf16>
    %c0_12 = arith.constant 0 : index
    %c0_13 = arith.constant 0 : index
    %17 = vector.load %arg6[%c0_12, %c0_13] : memref<128x128xbf16, #tpu.memory_space<vmem>>, vector<128x128xbf16>
    %cst_14 = arith.constant dense<0.000000e+00> : vector<16x128xf32>
    %18 = tpu.matmul %16, %17, %cst_14 {dimension_numbers = #tpu.dot_dimension_numbers<[1], [0], [0], [1], [0, 0, 1, 1], [], []>} : vector<16x128xbf16>, vector<128x128xbf16>, vector<16x128xf32> -> vector<16x128xf32>
    %c0_15 = arith.constant 0 : index
    %c0_16 = arith.constant 0 : index
    %19 = vector.load %arg7[%c0_15, %c0_16] : memref<1x128xf32, #tpu.memory_space<vmem>>, vector<1x128xf32>
    %20 = vector.broadcast %19 : vector<1x128xf32> to vector<16x128xf32>
    %21 = arith.addf %18, %20 : vector<16x128xf32>
    %c0_17 = arith.constant 0 : index
    %c0_18 = arith.constant 0 : index
    %22 = vector.load %arg8[%c0_17, %c0_18] : memref<16x128xf32, #tpu.memory_space<vmem>>, vector<16x128xf32>
    tpu.vector_store %arg8[%c0_17, %c0_18], %21 {strides = array<i32>} : memref<16x128xf32, #tpu.memory_space<vmem>>, vector<16x128xf32>,
    return
  }
  func.func @transform_0(%arg0: i32) -> (i32, i32) {
    %c0_i32 = arith.constant 0 : i32
    %c0_i32_0 = arith.constant 0 : i32
    return %arg0, %c0_i32 : i32, i32
  }
  func.func @transform_1(%arg0: i32) -> (i32, i32) {
    %c0_i32 = arith.constant 0 : i32
    %c0_i32_0 = arith.constant 0 : i32
    %c0_i32_1 = arith.constant 0 : i32
    return %c0_i32, %c0_i32_0 : i32, i32
  }
  func.func @transform_2(%arg0: i32) -> (i32, i32) {
    %c0_i32 = arith.constant 0 : i32
    %c0_i32_0 = arith.constant 0 : i32
    %c0_i32_1 = arith.constant 0 : i32
    return %c0_i32, %c0_i32_0 : i32, i32
  }
  func.func @transform_3(%arg0: i32) -> (i32, i32) {
    %c0_i32 = arith.constant 0 : i32
    %c0_i32_0 = arith.constant 0 : i32
    %c0_i32_1 = arith.constant 0 : i32
    return %c0_i32, %c0_i32_0 : i32, i32
  }
  func.func @transform_4(%arg0: i32) -> (i32, i32) {
    %c0_i32 = arith.constant 0 : i32
    %c0_i32_0 = arith.constant 0 : i32
    %c0_i32_1 = arith.constant 0 : i32
    return %c0_i32, %c0_i32_0 : i32, i32
  }
  func.func @transform_5(%arg0: i32) -> (i32, i32) {
    %c0_i32 = arith.constant 0 : i32
    %c0_i32_0 = arith.constant 0 : i32
    %c0_i32_1 = arith.constant 0 : i32
    return %c0_i32, %c0_i32_0 : i32, i32
  }
  func.func @transform_6(%arg0: i32) -> (i32, i32) {
    %c0_i32 = arith.constant 0 : i32
    %c0_i32_0 = arith.constant 0 : i32
    %c0_i32_1 = arith.constant 0 : i32
    return %c0_i32, %c0_i32_0 : i32, i32
  }
  func.func @transform_7(%arg0: i32) -> (i32, i32) {
    %c0_i32 = arith.constant 0 : i32
    %c0_i32_0 = arith.constant 0 : i32
    return %arg0, %c0_i32 : i32, i32
  }
}

</mosaic_0001>

<llo_original>
// kernel: ppo_policy_forward.1
$region0: #{ppo_policy_forward.1}
  #allocation0 [shape = 'u32[]', space=smem, size = 0x4, offset = 0x4, fixed_abs, tag = 'smem constant byte address 0x4 - core index']
  #allocation1 [shape = 'u32[144,128]{1,0:T(1,128)}', space=vmem, size = 0x12000, scoped, tag = 'internal scratch']
  %s0 = inlined_call_operand.hbm [shape: bf16[16,32], index: 0, kind: input, shape index: {}]
  %s1 = inlined_call_operand.hbm [shape: bf16[32,128], index: 1, kind: input, shape index: {}]
  %s2 = inlined_call_operand.hbm [shape: f32[1,128], index: 2, kind: input, shape index: {}]
  %s3 = inlined_call_operand.hbm [shape: bf16[128,128], index: 3, kind: input, shape index: {}]
  %s4 = inlined_call_operand.hbm [shape: f32[1,128], index: 4, kind: input, shape index: {}]
  %s5 = inlined_call_operand.hbm [shape: bf16[128,128], index: 5, kind: input, shape index: {}]
  %s6 = inlined_call_operand.hbm [shape: f32[1,128], index: 6, kind: input, shape index: {}]
  %s7 = inlined_call_operand.hbm [shape: f32[16,128], index: 7, kind: output, shape index: {}]
  %s8 = sld [smem:[#allocation0]]
  $region66: #{ppo_policy_forward.1} parent=0
    _
  %s10 = ssub.s32 1, %s8
  %s11 = scalar_select 0, %s10, %s8
  $region1: #{ppo_policy_forward.1} parent=0
    #allocation2 [shape = 'u8[4096]{0}', space=vmem, size = 0x1000, scoped, tag = 'input window, operand 0, single buffered']
    #allocation3 [shape = 's32[1]{0}', space=sflag, size = 0x4, scoped, tag = 'scoped memory for ppo_policy_forward.1']
    #allocation4 [shape = 's32[1]{0}', space=sflag, size = 0x4, scoped, tag = 'scoped memory for ppo_policy_forward.1']
    #allocation5 [shape = 'u8[8192]{0}', space=vmem, size = 0x2000, scoped, tag = 'input window, operand 1, single buffered']
    #allocation6 [shape = 's32[1]{0}', space=sflag, size = 0x4, scoped, tag = 'scoped memory for ppo_policy_forward.1']
    #allocation7 [shape = 'u8[512]{0}', space=vmem, size = 0x400, scoped, tag = 'input window, operand 2, single buffered']
    #allocation8 [shape = 'u8[32768]{0}', space=vmem, size = 0x8000, scoped, tag = 'input window, operand 3, single buffered']
    #allocation9 [shape = 's32[1]{0}', space=sflag, size = 0x4, scoped, tag = 'scoped memory for ppo_policy_forward.1']
    #allocation10 [shape = 'u8[512]{0}', space=vmem, size = 0x400, scoped, tag = 'input window, operand 4, single buffered']
    #allocation11 [shape = 'u8[32768]{0}', space=vmem, size = 0x8000, scoped, tag = 'input window, operand 5, single buffered']
    #allocation12 [shape = 's32[1]{0}', space=sflag, size = 0x4, scoped, tag = 'scoped memory for ppo_policy_forward.1']
    #allocation13 [shape = 'u8[512]{0}', space=vmem, size = 0x400, scoped, tag = 'input window, operand 6, single buffered']
    #allocation14 [shape = 'u8[8192]{0}', space=vmem, size = 0x2000, scoped, tag = 'output window, operand 0, single buffered']
    %12 = vsyncpa [#allocation3], 0
    %13 = vsyncpa [#allocation6], 0
    %14 = vsyncpa [#allocation9], 0
    %15 = vsyncpa [#allocation12], 0
    %16 = vsyncpa [#allocation4], 0
    // Predicated region
    $region2: #{ppo_policy_forward.1} parent=1 // pred_check
      _
    $region3: #{ppo_policy_forward.1} parent=1 // pred_check_branch
      %18 = sbr.rel (0) target = $region5
    $region4: #{ppo_policy_forward.1} parent=1 // pred_region
      %s20 = ssub.s32 128, 128
      %21 = vsyncadd [#allocation3], %s20
      %s22 = sshll.u32 [#allocation2], 4
      %s23 = int_to_ptr.vmem [resolvable:$true] %s22
      %28 = dma.hbm_to_vmem [thread:$0]  %s0, 128, %s23, [#allocation3], 64, 64, 4
    $region5: #{ppo_policy_forward.1} parent=1 // pred_fallthru
      _
    // Predicated region
    $region6: #{ppo_policy_forward.1} parent=1 // pred_check
      _
    $region7: #{ppo_policy_forward.1} parent=1 // pred_check_branch
      %30 = sbr.rel (0) target = $region9
    $region8: #{ppo_policy_forward.1} parent=1 // pred_region
      %s32 = ssub.s32 256, 256
      %33 = vsyncadd [#allocation6], %s32
      %s34 = sshll.u32 [#allocation5], 4
      %s35 = int_to_ptr.vmem [resolvable:$true] %s34
      %40 = dma.hbm_to_vmem [thread:$0]  %s1, 256, %s35, [#allocation6], 64, 64, 4
    $region9: #{ppo_policy_forward.1} parent=1 // pred_fallthru
      _
    // Predicated region
    $region10: #{ppo_policy_forward.1} parent=1 // pred_check
      _
    $region11: #{ppo_policy_forward.1} parent=1 // pred_check_branch
      %42 = sbr.rel (0) target = $region13
    $region12: #{ppo_policy_forward.1} parent=1 // pred_region
      %s44 = ssub.s32 16, 16
      %45 = vsyncadd [#allocation6], %s44
      %s47 = sshll.u32 [#allocation7], 4
      %s48 = int_to_ptr.vmem [resolvable:$true] %s47
      %50 = dma.hbm_to_vmem [thread:$0]  %s2, 16, %s48, [#allocation6]
    $region13: #{ppo_policy_forward.1} parent=1 // pred_fallthru
      _
    // Predicated region
    $region14: #{ppo_policy_forward.1} parent=1 // pred_check
      _
    $region15: #{ppo_policy_forward.1} parent=1 // pred_check_branch
      %52 = sbr.rel (0) target = $region17
    $region16: #{ppo_policy_forward.1} parent=1 // pred_region
      %s54 = ssub.s32 1024, 1024
      %55 = vsyncadd [#allocation9], %s54
      %s56 = sshll.u32 [#allocation8], 4
      %s57 = int_to_ptr.vmem [resolvable:$true] %s56
      %62 = dma.hbm_to_vmem [thread:$0]  %s3, 1024, %s57, [#allocation9], 64, 64, 4
    $region17: #{ppo_policy_forward.1} parent=1 // pred_fallthru
      _
    // Predicated region
    $region18: #{ppo_policy_forward.1} parent=1 // pred_check
      _
    $region19: #{ppo_policy_forward.1} parent=1 // pred_check_branch
      %64 = sbr.rel (0) target = $region21
    $region20: #{ppo_policy_forward.1} parent=1 // pred_region
      %s66 = ssub.s32 16, 16
      %67 = vsyncadd [#allocation9], %s66
      %s69 = sshll.u32 [#allocation10], 4
      %s70 = int_to_ptr.vmem [resolvable:$true] %s69
      %72 = dma.hbm_to_vmem [thread:$0]  %s4, 16, %s70, [#allocation9]
    $region21: #{ppo_policy_forward.1} parent=1 // pred_fallthru
      _
    // Predicated region
    $region22: #{ppo_policy_forward.1} parent=1 // pred_check
      _
    $region23: #{ppo_policy_forward.1} parent=1 // pred_check_branch
      %74 = sbr.rel (0) target = $region25
    $region24: #{ppo_policy_forward.1} parent=1 // pred_region
      %s76 = ssub.s32 1024, 1024
      %77 = vsyncadd [#allocation12], %s76
      %s78 = sshll.u32 [#allocation11], 4
      %s79 = int_to_ptr.vmem [resolvable:$true] %s78
      %84 = dma.hbm_to_vmem [thread:$0]  %s5, 1024, %s79, [#allocation12], 64, 64, 4
    $region25: #{ppo_policy_forward.1} parent=1 // pred_fallthru
      _
    // Predicated region
    $region26: #{ppo_policy_forward.1} parent=1 // pred_check
      _
    $region27: #{ppo_policy_forward.1} parent=1 // pred_check_branch
      %86 = sbr.rel (0) target = $region29
    $region28: #{ppo_policy_forward.1} parent=1 // pred_region
      %s88 = ssub.s32 16, 16
      %89 = vsyncadd [#allocation12], %s88
      %s91 = sshll.u32 [#allocation13], 4
      %s92 = int_to_ptr.vmem [resolvable:$true] %s91
      %94 = dma.hbm_to_vmem [thread:$0]  %s6, 16, %s92, [#allocation12]
    $region29: #{ppo_policy_forward.1} parent=1 // pred_fallthru
      _
    // Predicated region
    $region30: #{ppo_policy_forward.1} parent=1 // pred_check
      _
    $region31: #{ppo_policy_forward.1} parent=1 // pred_check_branch
      %96 = sbr.rel (0) target = $region33
    $region32: #{ppo_policy_forward.1} parent=1 // pred_region
      %97 = dma.done [#allocation3], 128
    $region33: #{ppo_policy_forward.1} parent=1 // pred_fallthru
      _
    // Predicated region
    $region34: #{ppo_policy_forward.1} parent=1 // pred_check
      _
    $region35: #{ppo_policy_forward.1} parent=1 // pred_check_branch
      %99 = sbr.rel (0) target = $region37
    $region36: #{ppo_policy_forward.1} parent=1 // pred_region
      %100 = dma.done [#allocation6], 256
    $region37: #{ppo_policy_forward.1} parent=1 // pred_fallthru
      _
    // Predicated region
    $region38: #{ppo_policy_forward.1} parent=1 // pred_check
      _
    $region39: #{ppo_policy_forward.1} parent=1 // pred_check_branch
      %102 = sbr.rel (0) target = $region41
    $region40: #{ppo_policy_forward.1} parent=1 // pred_region
      %103 = dma.done [#allocation6], 16
    $region41: #{ppo_policy_forward.1} parent=1 // pred_fallthru
      _
    // Predicated region
    $region42: #{ppo_policy_forward.1} parent=1 // pred_check
      _
    $region43: #{ppo_policy_forward.1} parent=1 // pred_check_branch
      %105 = sbr.rel (0) target = $region45
    $region44: #{ppo_policy_forward.1} parent=1 // pred_region
      %106 = dma.done [#allocation9], 1024
    $region45: #{ppo_policy_forward.1} parent=1 // pred_fallthru
      _
    // Predicated region
    $region46: #{ppo_policy_forward.1} parent=1 // pred_check
      _
    $region47: #{ppo_policy_forward.1} parent=1 // pred_check_branch
      %108 = sbr.rel (0) target = $region49
    $region48: #{ppo_policy_forward.1} parent=1 // pred_region
      %109 = dma.done [#allocation9], 16
    $region49: #{ppo_policy_forward.1} parent=1 // pred_fallthru
      _
    // Predicated region
    $region50: #{ppo_policy_forward.1} parent=1 // pred_check
      _
    $region51: #{ppo_policy_forward.1} parent=1 // pred_check_branch
      %111 = sbr.rel (0) target = $region53
    $region52: #{ppo_policy_forward.1} parent=1 // pred_region
      %112 = dma.done [#allocation12], 1024
    $region53: #{ppo_policy_forward.1} parent=1 // pred_fallthru
      _
    // Predicated region
    $region54: #{ppo_policy_forward.1} parent=1 // pred_check
      _
    $region55: #{ppo_policy_forward.1} parent=1 // pred_check_branch
      %114 = sbr.rel (0) target = $region57
    $region56: #{ppo_policy_forward.1} parent=1 // pred_region
      %115 = dma.done [#allocation12], 16
    $region57: #{ppo_policy_forward.1} parent=1 // pred_fallthru
      _
    %v117 = vld [vmem:[#allocation2] sm:$0xf]
    %v118 = vld [vmem:[#allocation2 + $0x4] sm:$0xf]
    %v119 = vld [vmem:[#allocation5] sm:$0xf]
    %v120 = vld [vmem:[#allocation5 + $0x4] sm:$0xf]
    %v121 = vld [vmem:[#allocation5 + $0x8] sm:$0xf]
    %v122 = vld [vmem:[#allocation5 + $0xc] sm:$0xf]
    %v123 = vld [vmem:[#allocation7] sm:$0x1]
    %v125 = vlaneseq
    %v126 = vshrl.u32 %v125, 7
    %v127 = vsub.s32 0, %v126
    %v128 = vrot.slane %v123, %v127
    %v132 = vunpack.c.l.b16 %v117
    %v133 = vunpack.c.l.b16 %v118
    %v134 = vpack.c.b16 %v133, %v132
    %v139 = vunpack.c.l.b16 %v119
    %v140 = vunpack.c.l.b16 %v120
    %v141 = vunpack.c.l.b16 %v121
    %v142 = vunpack.c.l.b16 %v122
    %v143 = vpack.c.b16 %v140, %v139
    %v144 = vpack.c.b16 %v142, %v141
    %vm147 = vcmask 261120
    %v149 = vsel %vm147, %v134, 0
    %151 = vmatprep.subr.bf16.mxu0 0
    %152 = vmatpush1.bf16.msra.mxu0 %v143
    %153 = vmatprep.subr.bf16.mxu0 0
    %154 = vmatpush1.bf16.msra.mxu0 %v144
    %155 = vmatprep.subr.bf16.mxu0 0
    %156 = vmatpush1.bf16.msra.mxu0 0
    %157 = vmatprep.subr.bf16.mxu0 0
    %158 = vmatpush1.bf16.msra.mxu0 0
    %159 = vmatprep.subr.bf16.mxu0 0
    %160 = vmatpush1.bf16.msra.mxu0 0
    %161 = vmatprep.subr.bf16.mxu0 0
    %162 = vmatpush1.bf16.msra.mxu0 0
    %163 = vmatprep.subr.bf16.mxu0 0
    %164 = vmatpush1.bf16.msra.mxu0 0
    %165 = vmatprep.subr.bf16.mxu0 0
    %166 = vmatpush1.bf16.msra.mxu0 0
    %167 = vmatprep.subr.bf16.mxu0 0
    %168 = vmatpush1.bf16.msra.mxu0 0
    %169 = vmatprep.subr.bf16.mxu0 0
    %170 = vmatpush1.bf16.msra.mxu0 0
    %171 = vmatprep.subr.bf16.mxu0 0
    %172 = vmatpush1.bf16.msra.mxu0 0
    %173 = vmatprep.subr.bf16.mxu0 0
    %174 = vmatpush1.bf16.msra.mxu0 0
    %175 = vmatprep.subr.bf16.mxu0 0
    %176 = vmatpush1.bf16.msra.mxu0 0
    %177 = vmatprep.subr.bf16.mxu0 0
    %178 = vmatpush1.bf16.msra.mxu0 0
    %179 = vmatprep.subr.bf16.mxu0 0
    %180 = vmatpush1.bf16.msra.mxu0 0
    %181 = vmatprep.subr.bf16.mxu0 0
    %182 = vmatpush1.bf16.msra.mxu0 0
    %183 = vmatprep.mubr.bf16.mxu0 0
    %184 = vmatmul.mubr.bf16.gmra.mrb[0].mxu0 %v149
    %v185 = vpop.f32.mrb[0].mxu0
    %v186 = vadd.f32 %v128, %v185
    %v187 = vpop.f32.mrb[0].mxu0
    %v188 = vpop.f32.mrb[0].mxu0
    %v189 = vadd.f32 %v128, %v188
    %v190 = vpop.f32.mrb[0].mxu0
    %191 = vdwg.mxu0
    %v192 = vmax.f32 %v186, 0.0
    %v193 = vmax.f32 %v189, 0.0
    %v194 = vpack.c.bf16 %v193, %v192
    %v195 = vld [vmem:[#allocation8] sm:$0xf]
    %v196 = vld [vmem:[#allocation8 + $0x4] sm:$0xf]
    %v197 = vld [vmem:[#allocation8 + $0x8] sm:$0xf]
    %v198 = vld [vmem:[#allocation8 + $0xc] sm:$0xf]
    %v199 = vld [vmem:[#allocation8 + $0x10] sm:$0xf]
    %v200 = vld [vmem:[#allocation8 + $0x14] sm:$0xf]
    %v201 = vld [vmem:[#allocation8 + $0x18] sm:$0xf]
    %v202 = vld [vmem:[#allocation8 + $0x1c] sm:$0xf]
    %v203 = vld [vmem:[#allocation8 + $0x20] sm:$0xf]
    %v204 = vld [vmem:[#allocation8 + $0x24] sm:$0xf]
    %v205 = vld [vmem:[#allocation8 + $0x28] sm:$0xf]
    %v206 = vld [vmem:[#allocation8 + $0x2c] sm:$0xf]
    %v207 = vld [vmem:[#allocation8 + $0x30] sm:$0xf]
    %v208 = vld [vmem:[#allocation8 + $0x34] sm:$0xf]
    %v209 = vld [vmem:[#allocation8 + $0x38] sm:$0xf]
    %v210 = vld [vmem:[#allocation8 + $0x3c] sm:$0xf]
    %v211 = vld [vmem:[#allocation10] sm:$0x1]
    %v213 = vlaneseq
    %v214 = vshrl.u32 %v213, 7
    %v215 = vsub.s32 0, %v214
    %v216 = vrot.slane %v211, %v215
    %v234 = vunpack.c.l.b16 %v195
    %v235 = vunpack.c.l.b16 %v196
    %v236 = vunpack.c.l.b16 %v197
    %v237 = vunpack.c.l.b16 %v198
    %v238 = vunpack.c.l.b16 %v199
    %v239 = vunpack.c.l.b16 %v200
    %v240 = vunpack.c.l.b16 %v201
    %v241 = vunpack.c.l.b16 %v202
    %v242 = vunpack.c.l.b16 %v203
    %v243 = vunpack.c.l.b16 %v204
    %v244 = vunpack.c.l.b16 %v205
    %v245 = vunpack.c.l.b16 %v206
    %v246 = vunpack.c.l.b16 %v207
    %v247 = vunpack.c.l.b16 %v208
    %v248 = vunpack.c.l.b16 %v209
    %v249 = vunpack.c.l.b16 %v210
    %v250 = vpack.c.b16 %v235, %v234
    %v251 = vpack.c.b16 %v237, %v236
    %v252 = vpack.c.b16 %v239, %v238
    %v253 = vpack.c.b16 %v241, %v240
    %v254 = vpack.c.b16 %v243, %v242
    %v255 = vpack.c.b16 %v245, %v244
    %v256 = vpack.c.b16 %v247, %v246
    %v257 = vpack.c.b16 %v249, %v248
    %266 = vmatprep.subr.bf16.mxu0 0
    %267 = vmatpush1.bf16.msra.mxu0 %v250
    %268 = vmatprep.subr.bf16.mxu0 0
    %269 = vmatpush1.bf16.msra.mxu0 %v251
    %270 = vmatprep.subr.bf16.mxu0 0
    %271 = vmatpush1.bf16.msra.mxu0 %v252
    %272 = vmatprep.subr.bf16.mxu0 0
    %273 = vmatpush1.bf16.msra.mxu0 %v253
    %274 = vmatprep.subr.bf16.mxu0 0
    %275 = vmatpush1.bf16.msra.mxu0 %v254
    %276 = vmatprep.subr.bf16.mxu0 0
    %277 = vmatpush1.bf16.msra.mxu0 %v255
    %278 = vmatprep.subr.bf16.mxu0 0
    %279 = vmatpush1.bf16.msra.mxu0 %v256
    %280 = vmatprep.subr.bf16.mxu0 0
    %281 = vmatpush1.bf16.msra.mxu0 %v257
    %282 = vmatprep.subr.bf16.mxu0 0
    %283 = vmatpush1.bf16.msra.mxu0 0
    %284 = vmatprep.subr.bf16.mxu0 0
    %285 = vmatpush1.bf16.msra.mxu0 0
    %286 = vmatprep.subr.bf16.mxu0 0
    %287 = vmatpush1.bf16.msra.mxu0 0
    %288 = vmatprep.subr.bf16.mxu0 0
    %289 = vmatpush1.bf16.msra.mxu0 0
    %290 = vmatprep.subr.bf16.mxu0 0
    %291 = vmatpush1.bf16.msra.mxu0 0
    %292 = vmatprep.subr.bf16.mxu0 0
    %293 = vmatpush1.bf16.msra.mxu0 0
    %294 = vmatprep.subr.bf16.mxu0 0
    %295 = vmatpush1.bf16.msra.mxu0 0
    %296 = vmatprep.subr.bf16.mxu0 0
    %297 = vmatpush1.bf16.msra.mxu0 0
    %298 = vmatprep.mubr.bf16.mxu0 0
    %299 = vmatmul.mubr.bf16.gmra.mrb[0].mxu0 %v194
    %v300 = vpop.f32.mrb[0].mxu0
    %v301 = vadd.f32 %v216, %v300
    %v302 = vpop.f32.mrb[0].mxu0
    %v303 = vpop.f32.mrb[0].mxu0
    %v304 = vadd.f32 %v216, %v303
    %v305 = vpop.f32.mrb[0].mxu0
    %306 = vdwg.mxu0
    %v307 = vmax.f32 %v301, 0.0
    %v308 = vmax.f32 %v304, 0.0
    %v309 = vpack.c.bf16 %v308, %v307
    %v310 = vld [vmem:[#allocation11] sm:$0xf]
    %v311 = vld [vmem:[#allocation11 + $0x4] sm:$0xf]
    %v312 = vld [vmem:[#allocation11 + $0x8] sm:$0xf]
    %v313 = vld [vmem:[#allocation11 + $0xc] sm:$0xf]
    %v314 = vld [vmem:[#allocation11 + $0x10] sm:$0xf]
    %v315 = vld [vmem:[#allocation11 + $0x14] sm:$0xf]
    %v316 = vld [vmem:[#allocation11 + $0x18] sm:$0xf]
    %v317 = vld [vmem:[#allocation11 + $0x1c] sm:$0xf]
    %v318 = vld [vmem:[#allocation11 + $0x20] sm:$0xf]
    %v319 = vld [vmem:[#allocation11 + $0x24] sm:$0xf]
    %v320 = vld [vmem:[#allocation11 + $0x28] sm:$0xf]
    %v321 = vld [vmem:[#allocation11 + $0x2c] sm:$0xf]
    %v322 = vld [vmem:[#allocation11 + $0x30] sm:$0xf]
    %v323 = vld [vmem:[#allocation11 + $0x34] sm:$0xf]
    %v324 = vld [vmem:[#allocation11 + $0x38] sm:$0xf]
    %v325 = vld [vmem:[#allocation11 + $0x3c] sm:$0xf]
    %v326 = vld [vmem:[#allocation13] sm:$0x1]
    %v328 = vlaneseq
    %v329 = vshrl.u32 %v328, 7
    %v330 = vsub.s32 0, %v329
    %v331 = vrot.slane %v326, %v330
    %v349 = vunpack.c.l.b16 %v310
    %v350 = vunpack.c.l.b16 %v311
    %v351 = vunpack.c.l.b16 %v312
    %v352 = vunpack.c.l.b16 %v313
    %v353 = vunpack.c.l.b16 %v314
    %v354 = vunpack.c.l.b16 %v315
    %v355 = vunpack.c.l.b16 %v316
    %v356 = vunpack.c.l.b16 %v317
    %v357 = vunpack.c.l.b16 %v318
    %v358 = vunpack.c.l.b16 %v319
    %v359 = vunpack.c.l.b16 %v320
    %v360 = vunpack.c.l.b16 %v321
    %v361 = vunpack.c.l.b16 %v322
    %v362 = vunpack.c.l.b16 %v323
    %v363 = vunpack.c.l.b16 %v324
    %v364 = vunpack.c.l.b16 %v325
    %v365 = vpack.c.b16 %v350, %v349
    %v366 = vpack.c.b16 %v352, %v351
    %v367 = vpack.c.b16 %v354, %v353
    %v368 = vpack.c.b16 %v356, %v355
    %v369 = vpack.c.b16 %v358, %v357
    %v370 = vpack.c.b16 %v360, %v359
    %v371 = vpack.c.b16 %v362, %v361
    %v372 = vpack.c.b16 %v364, %v363
    %381 = vmatprep.subr.bf16.mxu0 0
    %382 = vmatpush1.bf16.msra.mxu0 %v365
    %383 = vmatprep.subr.bf16.mxu0 0
    %384 = vmatpush1.bf16.msra.mxu0 %v366
    %385 = vmatprep.subr.bf16.mxu0 0
    %386 = vmatpush1.bf16.msra.mxu0 %v367
    %387 = vmatprep.subr.bf16.mxu0 0
    %388 = vmatpush1.bf16.msra.mxu0 %v368
    %389 = vmatprep.subr.bf16.mxu0 0
    %390 = vmatpush1.bf16.msra.mxu0 %v369
    %391 = vmatprep.subr.bf16.mxu0 0
    %392 = vmatpush1.bf16.msra.mxu0 %v370
    %393 = vmatprep.subr.bf16.mxu0 0
    %394 = vmatpush1.bf16.msra.mxu0 %v371
    %395 = vmatprep.subr.bf16.mxu0 0
    %396 = vmatpush1.bf16.msra.mxu0 %v372
    %397 = vmatprep.subr.bf16.mxu0 0
    %398 = vmatpush1.bf16.msra.mxu0 0
    %399 = vmatprep.subr.bf16.mxu0 0
    %400 = vmatpush1.bf16.msra.mxu0 0
    %401 = vmatprep.subr.bf16.mxu0 0
    %402 = vmatpush1.bf16.msra.mxu0 0
    %403 = vmatprep.subr.bf16.mxu0 0
    %404 = vmatpush1.bf16.msra.mxu0 0
    %405 = vmatprep.subr.bf16.mxu0 0
    %406 = vmatpush1.bf16.msra.mxu0 0
    %407 = vmatprep.subr.bf16.mxu0 0
    %408 = vmatpush1.bf16.msra.mxu0 0
    %409 = vmatprep.subr.bf16.mxu0 0
    %410 = vmatpush1.bf16.msra.mxu0 0
    %411 = vmatprep.subr.bf16.mxu0 0
    %412 = vmatpush1.bf16.msra.mxu0 0
    %413 = vmatprep.mubr.bf16.mxu0 0
    %414 = vmatmul.mubr.bf16.gmra.mrb[0].mxu0 %v309
    %v415 = vpop.f32.mrb[0].mxu0
    %v416 = vadd.f32 %v331, %v415
    %v417 = vpop.f32.mrb[0].mxu0
    %v418 = vpop.f32.mrb[0].mxu0
    %v419 = vadd.f32 %v331, %v418
    %v420 = vpop.f32.mrb[0].mxu0
    %421 = vdwg.mxu0
    %422 = vst [vmem:[#allocation14] sm:$0xff] %v416
    %423 = vst [vmem:[#allocation14 + $0x8] sm:$0xff] %v419
    // Predicated region
    $region58: #{ppo_policy_forward.1} parent=1 // pred_check
      _
    $region59: #{ppo_policy_forward.1} parent=1 // pred_check_branch
      %425 = sbr.rel (0) target = $region61
    $region60: #{ppo_policy_forward.1} parent=1 // pred_region
      %s427 = ssub.s32 256, 256
      %428 = vsyncadd [#allocation4], %s427
      %s429 = sshll.u32 [#allocation14], 4
      %s430 = int_to_ptr.vmem [resolvable:$true] %s429
      %435 = dma.vmem_to_hbm [thread:$0]  %s430, 256, %s7, [#allocation4], 128, 128, 8
    $region61: #{ppo_policy_forward.1} parent=1 // pred_fallthru
      _
    // Predicated region
    $region62: #{ppo_policy_forward.1} parent=1 // pred_check
      _
    $region63: #{ppo_policy_forward.1} parent=1 // pred_check_branch
      %437 = sbr.rel (0) target = $region65
    $region64: #{ppo_policy_forward.1} parent=1 // pred_region
      %438 = dma.done [#allocation4], 256
    $region65: #{ppo_policy_forward.1} parent=1 // pred_fallthru
      _
    %439 = vsyncpa [#allocation3], 1
    %440 = vsyncpa [#allocation6], 1
    %441 = vsyncpa [#allocation9], 1
    %442 = vsyncpa [#allocation12], 1
    %443 = vsyncpa [#allocation4], 1

</llo_original>
